<compile_context>
chip_gen: v5e
topology: v5e:2x2
jax: 0.10.0
libtpu: 0.0.40
codegen_flags: <defaults>
</compile_context>

<pallas_src>
import math
import functools

import jax
import jax.numpy as jnp
from jax import lax
from jax.experimental import pallas as pl
from jax.experimental.pallas import tpu as pltpu


def _cdiv(a: int, b: int) -> int:
    return (a + b - 1) // b


def _round_up(x: int, m: int) -> int:
    return _cdiv(x, m) * m


def _choose_tile(size: int, quantum: int, max_tile: int) -> int:
    """Tile size for one dimension.

    If the whole dimension fits in one tile, use the full dim (a block shape
    equal to the full array dim is always layout-legal, even if unaligned).
    Otherwise split near-equally and round the tile up to `quantum`, so the
    ragged last block wastes < one quantum + split remainder instead of up to
    a whole max_tile.
    """
    if size <= max_tile:
        return size
    n_tiles = _cdiv(size, max_tile)
    return _round_up(_cdiv(size, n_tiles), quantum)


def _affinity_kernel(x_ref, y_ref, a_ref, o_ref, xa_ref, *, use_bf16_mxu):
    # x_ref: (1, tn, d)   y_ref: (1, tm, d)   a_ref: (d, d) (pre-symmetrised)
    # o_ref: (1, tn, tm)  xa_ref: VMEM scratch (tn, d)
    j = pl.program_id(2)

    # X @ A_sym depends only on (b, i): compute once per (b, i) sweep and
    # reuse it for every M tile (the j axis is marked "arbitrary").
    @pl.when(j == 0)
    def _():
        x = x_ref[0]
        a = a_ref[...]
        if use_bf16_mxu:
            x = x.astype(jnp.bfloat16)
            a = a.astype(jnp.bfloat16)
        xa = jnp.dot(x, a, preferred_element_type=jnp.float32)
        xa_ref[...] = xa.astype(xa_ref.dtype)

    y = y_ref[0]
    if use_bf16_mxu:
        y = y.astype(jnp.bfloat16)
    # NT contraction (contract the last dim of both operands): lowers to an
    # MXU matmul without an explicit (tm, d) transpose (flash-attention form).
    m = lax.dot_general(xa_ref[...], y, (((1,), (1,)), ((), ())),
                        preferred_element_type=jnp.float32)
    o_ref[0] = m.astype(o_ref.dtype)


def affinity(X: jax.Array, Y: jax.Array, A: jax.Array,
             *, max_tn: int = 512, max_tm: int = 1024,
             use_bf16_mxu: bool = False, out_dtype=None) -> jax.Array:
    """Computes M = X @ ((A + A^T)/2) @ Y^T, batched over the leading dim."""
    B, N, d = X.shape
    Bm, M, dy = Y.shape
    assert B == Bm and d == dy and A.shape == (d, d)

    if out_dtype is None:
        out_dtype = jnp.result_type(X.dtype, Y.dtype)

    # Symmetrise once outside the kernel (batch-invariant), keep param dtype.
    A_sym = (A + A.T) * 0.5

    # Sublane quantum for the N-tile: 8 for 32-bit, 16 for bf16 inputs/outputs.
    n_quantum = max(8,
                    32 // jnp.dtype(X.dtype).itemsize,
                    32 // jnp.dtype(out_dtype).itemsize)
    tn = _choose_tile(N, n_quantum, max_tn)
    tm = _choose_tile(M, 128, max_tm)     # 128 -> lane-dense output stores
    n_i = _cdiv(N, tn)
    m_j = _cdiv(M, tm)
    grid = (B, n_i, m_j)

    scratch_dtype = jnp.bfloat16 if use_bf16_mxu else jnp.float32

    flops = 2 * B * (n_i * tn * d * d + (n_i * tn) * (m_j * tm) * d)
    bytes_accessed = (B * N * d * jnp.dtype(X.dtype).itemsize
                      + n_i * B * M * d * jnp.dtype(Y.dtype).itemsize
                      + d * d * jnp.dtype(A_sym.dtype).itemsize
                      + B * N * M * jnp.dtype(out_dtype).itemsize)

    kernel = functools.partial(_affinity_kernel, use_bf16_mxu=use_bf16_mxu)

    return pl.pallas_call(
        kernel,
        out_shape=jax.ShapeDtypeStruct((B, N, M), out_dtype),
        grid_spec=pltpu.PrefetchScalarGridSpec(
            num_scalar_prefetch=0,
            grid=grid,
            in_specs=[
                pl.BlockSpec((1, tn, d), lambda b, i, j: (b, i, 0)),
                pl.BlockSpec((1, tm, d), lambda b, i, j: (b, j, 0)),
                pl.BlockSpec((d, d), lambda b, i, j: (0, 0)),
            ],
            out_specs=pl.BlockSpec((1, tn, tm), lambda b, i, j: (b, i, j)),
            scratch_shapes=[pltpu.VMEM((tn, d), scratch_dtype)],
        ),
        compiler_params=pltpu.CompilerParams(
            dimension_semantics=("parallel", "parallel", "arbitrary"),
            vmem_limit_bytes=64 * 1024 * 1024,
        ),
        cost_estimate=pl.CostEstimate(
            flops=flops, transcendentals=0, bytes_accessed=bytes_accessed),
    )(X, Y, A_sym)


def init_affinity_params(key: jax.Array, d: int) -> jax.Array:
    """Deterministic re-implementation of Affinity._reset_parameters."""
    stdv = 1.0 / math.sqrt(d)
    A = jax.random.uniform(key, (d, d), jnp.float32, minval=-stdv, maxval=stdv)
    A = A + jnp.eye(d, dtype=jnp.float32)
    return A


def _reference(X, Y, A):
    A_sym = (A + A.T) / 2.0
    return jnp.einsum("bnd,de,bme->bnm", X, A_sym, Y)


if __name__ == "__main__":
    key = jax.random.PRNGKey(0)
    k_a, k_x, k_y, k_x2, k_y2 = jax.random.split(key, 5)

    # Small demo shapes consistent with the module.
    B, N, M, d = 2, 8, 8, 32
    A = init_affinity_params(k_a, d)
    X = jax.random.normal(k_x, (B, N, d), jnp.float32)
    Y = jax.random.normal(k_y, (B, M, d), jnp.float32)

    out = affinity(X, Y, A)
    jax.block_until_ready(out)
    ref = _reference(X, Y, A)
    assert out.shape == (B, N, M)
    assert jnp.allclose(out, ref, atol=1e-4, rtol=1e-4)

    # Non-aligned shapes with small forced tiles to exercise the multi-tile
    # path, including a ragged (masked) last M tile — no padding, no slicing.
    N2, M2 = 72, 200
    X2 = jax.random.normal(k_x2, (B, N2, d), jnp.float32)
    Y2 = jax.random.normal(k_y2, (B, M2, d), jnp.float32)
    out2 = affinity(X2, Y2, A, max_tn=32, max_tm=128)
    jax.block_until_ready(out2)
    ref2 = _reference(X2, Y2, A)
    assert out2.shape == (B, N2, M2)
    assert jnp.allclose(out2, ref2, atol=1e-4, rtol=1e-4)

    print("KERNEL_OK")
</pallas_src>

<mosaic_0001>
module attributes {stable_mosaic.version = 11 : i64} {
  func.func @_affinity_kernel(%arg0: i32, %arg1: i32, %arg2: i32, %arg3: memref<1x8x32xf32, #tpu.memory_space<vmem>>, %arg4: memref<1x8x32xf32, #tpu.memory_space<vmem>>, %arg5: memref<32x32xf32, #tpu.memory_space<vmem>>, %arg6: memref<1x8x8xf32, #tpu.memory_space<vmem>>, %arg7: memref<8x32xf32, #tpu.memory_space<vmem>>) attributes {dimension_semantics = [#tpu.dimension_semantics<parallel>, #tpu.dimension_semantics<parallel>, #tpu.dimension_semantics<arbitrary>], iteration_bounds = array<i64: 2, 1, 1>, scalar_prefetch = 0 : i64, scratch_operands = 1 : i64, tpu.core_type = #tpu.core_type<tc>, window_params = [{transform_indices = @transform_0, window_bounds = array<i64: 1, 8, 32>}, {transform_indices = @transform_1, window_bounds = array<i64: 1, 8, 32>}, {pipeline_mode = #tpu.pipeline_mode<synchronous>, transform_indices = @transform_2, window_bounds = array<i64: 32, 32>}, {transform_indices = @transform_3, window_bounds = array<i64: 1, 8, 8>}]} {
    %c0_i32 = arith.constant 0 : i32
    %0 = arith.cmpi eq, %arg2, %c0_i32 : i32
    %1 = arith.extui %0 : i1 to i32
    %c0_i32_0 = arith.constant 0 : i32
    %2 = arith.cmpi ne, %1, %c0_i32_0 : i32
    scf.if %2 {
      %c0_8 = arith.constant 0 : index
      %c0_9 = arith.constant 0 : index
      %c0_10 = arith.constant 0 : index
      %10 = vector.load %arg3[%c0_8, %c0_9, %c0_10] : memref<1x8x32xf32, #tpu.memory_space<vmem>>, vector<1x8x32xf32>
      %11 = vector.shape_cast %10 : vector<1x8x32xf32> to vector<8x32xf32>
      %c0_11 = arith.constant 0 : index
      %c0_12 = arith.constant 0 : index
      %12 = vector.load %arg5[%c0_11, %c0_12] : memref<32x32xf32, #tpu.memory_space<vmem>>, vector<32x32xf32>
      %cst_13 = arith.constant dense<0.000000e+00> : vector<8x32xf32>
      %13 = tpu.matmul %11, %12, %cst_13 {dimension_numbers = #tpu.dot_dimension_numbers<[1], [0], [0], [1], [0, 0, 1, 1], [], []>} : vector<8x32xf32>, vector<32x32xf32>, vector<8x32xf32> -> vector<8x32xf32>
      %c0_14 = arith.constant 0 : index
      %c0_15 = arith.constant 0 : index
      %14 = vector.load %arg7[%c0_14, %c0_15] : memref<8x32xf32, #tpu.memory_space<vmem>>, vector<8x32xf32>
      tpu.vector_store %arg7[%c0_14, %c0_15], %13 {strides = array<i32>} : memref<8x32xf32, #tpu.memory_space<vmem>>, vector<8x32xf32>,
    } else {
    }
    %c0 = arith.constant 0 : index
    %c0_1 = arith.constant 0 : index
    %c0_2 = arith.constant 0 : index
    %3 = vector.load %arg4[%c0, %c0_1, %c0_2] : memref<1x8x32xf32, #tpu.memory_space<vmem>>, vector<1x8x32xf32>
    %4 = vector.shape_cast %3 : vector<1x8x32xf32> to vector<8x32xf32>
    %c0_3 = arith.constant 0 : index
    %c0_4 = arith.constant 0 : index
    %5 = vector.load %arg7[%c0_3, %c0_4] : memref<8x32xf32, #tpu.memory_space<vmem>>, vector<8x32xf32>
    %cst = arith.constant dense<0.000000e+00> : vector<8x8xf32>
    %6 = tpu.matmul %5, %4, %cst {dimension_numbers = #tpu.dot_dimension_numbers<[1], [1], [0], [0], [0, 0, 1, 0], [], []>} : vector<8x32xf32>, vector<8x32xf32>, vector<8x8xf32> -> vector<8x8xf32>
    %c0_5 = arith.constant 0 : index
    %c0_6 = arith.constant 0 : index
    %c0_7 = arith.constant 0 : index
    %7 = vector.load %arg6[%c0_5, %c0_6, %c0_7] : memref<1x8x8xf32, #tpu.memory_space<vmem>>, vector<1x8x8xf32>
    %8 = vector.shape_cast %7 : vector<1x8x8xf32> to vector<8x8xf32>
    %9 = vector.shape_cast %6 : vector<8x8xf32> to vector<1x8x8xf32>
    tpu.vector_store %arg6[%c0_5, %c0_6, %c0_7], %9 {strides = array<i32>} : memref<1x8x8xf32, #tpu.memory_space<vmem>>, vector<1x8x8xf32>,
    return
  }
  func.func @transform_0(%arg0: i32, %arg1: i32, %arg2: i32) -> (i32, i32, i32) {
    %c0_i32 = arith.constant 0 : i32
    %c0_i32_0 = arith.constant 0 : i32
    return %arg0, %arg1, %c0_i32 : i32, i32, i32
  }
  func.func @transform_1(%arg0: i32, %arg1: i32, %arg2: i32) -> (i32, i32, i32) {
    %c0_i32 = arith.constant 0 : i32
    %c0_i32_0 = arith.constant 0 : i32
    return %arg0, %arg2, %c0_i32 : i32, i32, i32
  }
  func.func @transform_2(%arg0: i32, %arg1: i32, %arg2: i32) -> (i32, i32) {
    %c0_i32 = arith.constant 0 : i32
    %c0_i32_0 = arith.constant 0 : i32
    %c0_i32_1 = arith.constant 0 : i32
    return %c0_i32, %c0_i32_0 : i32, i32
  }
  func.func @transform_3(%arg0: i32, %arg1: i32, %arg2: i32) -> (i32, i32, i32) {
    %c0_i32 = arith.constant 0 : i32
    return %arg0, %arg1, %arg2 : i32, i32, i32
  }
}

</mosaic_0001>

<llo_original>
// kernel: tpu_custom_call.1
$region0: #{tpu_custom_call.1}
  #allocation0 [shape = 'u32[]', space=smem, size = 0x4, offset = 0x4, fixed_abs, tag = 'smem constant byte address 0x4 - core index']
  #allocation1 [shape = 'u32[72,128]{1,0:T(1,128)}', space=vmem, size = 0x9000, scoped, tag = 'internal scratch']
  #allocation2 [shape = 'f32[8,32]{1,0:T(8,128)}', space=vmem, size = 0x1000, scoped, tag = 'scratch operand']
  %s0 = inlined_call_operand.hbm [shape: f32[2,8,32], index: 0, kind: input, shape index: {}]
  %s1 = inlined_call_operand.hbm [shape: f32[2,8,32], index: 1, kind: input, shape index: {}]
  %s2 = inlined_call_operand.hbm [shape: f32[32,32], index: 2, kind: input, shape index: {}]
  %s3 = inlined_call_operand.hbm [shape: f32[2,8,8], index: 3, kind: output, shape index: {}]
  %s4 = sld [smem:[#allocation0]]
  $region61: #{tpu_custom_call.1} parent=0
    _
  %s6 = ssub.s32 1, %s4
  %s7 = scalar_select 0, %s6, %s4
  $region1: #{tpu_custom_call.1} parent=0
    #allocation3 [shape = 'u8[8192]{0}', space=vmem, size = 0x2000, scoped, tag = 'input window, operand 0']
    #allocation4 [shape = 's32[2]{0}', space=sflag, size = 0x8, scoped, tag = 'scoped memory for tpu_custom_call.1']
    #allocation5 [shape = 's32[2]{0}', space=sflag, size = 0x8, scoped, tag = 'scoped memory for tpu_custom_call.1']
    #allocation6 [shape = 'u8[8192]{0}', space=vmem, size = 0x2000, scoped, tag = 'input window, operand 1']
    #allocation7 [shape = 's32[2]{0}', space=sflag, size = 0x8, scoped, tag = 'scoped memory for tpu_custom_call.1']
    #allocation8 [shape = 'u8[16384]{0}', space=vmem, size = 0x4000, scoped, tag = 'input window, operand 2, single buffered']
    #allocation9 [shape = 'u8[8192]{0}', space=vmem, size = 0x2000, scoped, tag = 'output window, operand 0']
    %8 = vsyncpa [#allocation4], 0
    %s9 = scalar_lea.sflag [#allocation4], 1
    %10 = vsyncpa %s9, 0
    %11 = vsyncpa [#allocation7], 0
    %s12 = scalar_lea.sflag [#allocation7], 1
    %13 = vsyncpa %s12, 0
    %14 = vsyncpa [#allocation5], 0
    %s15 = scalar_lea.sflag [#allocation5], 1
    %16 = vsyncpa %s15, 0
    loop: start=0, step=1, limit=4
    $region2: #{tpu_custom_call.1} parent=1 // loop_pre_header
      _
    $region3: #{tpu_custom_call.1} parent=1 // loop_header
      %s18 = sphi 0, %s22
      %p19 = scmp.ge.s32.totalorder %s18, 4
      %s25 = sphi 0, %s44
      %s26 = sphi 0, %s40
      %s27 = sphi 0, %s36
      %s28 = sphi 0, %s25
      %s29 = sphi 0, %s26
      %s30 = sphi 0, %s27
      %s31 = sphi 0, %s28
      %s32 = sphi 0, %s29
      %s33 = sphi 0, %s30
      %s49 = sphi 0, %s51
      %s52 = sphi 0, %s49
      %s53 = sphi 0, %s52
      %s69 = sphi 0, %s53
      %s77 = sphi 0, %s79
      %s80 = sphi 0, %s77
      %s81 = sphi 0, %s80
      %s97 = sphi 0, %s81
      %s101 = sphi 0, %s101
      %s103 = sphi 0, %s101
      %s104 = sphi 0, %s103
      %s118 = sphi 0, %s104
      %s128 = sphi 0, %s130
      %s131 = sphi 0, %s128
      %s132 = sphi 0, %s131
      %s148 = sphi 0, %s132
    $region4: #{tpu_custom_call.1} parent=1 // loop_header_branch
      %21 = sbr.rel (%p19) target = $region8
    $region5: #{tpu_custom_call.1} parent=1 // loop_body
      %s23 = ssub.s32 %s18, 1
      %s24 = ssub.s32 %s18, 2
      %s34 = sadd.s32 1, %s27
      %p35 = scmp.ge.s32.totalorder %s34, 1
      %s36 = scalar_select %p35, 0, %s34
      %s37 = sadd.s32 1, %s26
      %s38 = scalar_select %p35, %s37, %s26
      %p39 = scmp.ge.s32.totalorder %s38, 1
      %s40 = scalar_select %p39, 0, %s38
      %s41 = sadd.s32 1, %s25
      %s42 = scalar_select %p39, %s41, %s25
      %p43 = scmp.ge.s32.totalorder %s42, 2
      %s44 = scalar_select %p43, 0, %s42
      %s45 = ssub.s32 %s25, %s44
      %s46 = ssub.s32 %s26, %s40
      %s47 = sor.u32 %s45, %s46
      %p48 = scmp.eq.s32.totalorder %s47, 0
      %s50 = sadd.s32 %s49, 1
      %s51 = scalar_select %p48, %s49, %s50
      %p54 = pneg %p48
      %p55 = scmp.eq.s32.totalorder %s18, 1
      %p56 = por %p54, %p55
      %p57 = scmp.ne.s32.totalorder %s49, %s52
      %p58 = scmp.eq.s32.totalorder %s18, 0
      %p59 = por %p57, %p58
      %p60 = scmp.ne.s32.totalorder %s49, %s52
      %p61 = scmp.eq.s32.totalorder %s23, 1
      %p62 = por %p60, %p61
      %p63 = scmp.ne.s32.totalorder %s52, %s53
      %p64 = scmp.eq.s32.totalorder %s23, 0
      %p65 = por %p63, %p64
      %p66 = scmp.ne.s32.totalorder %s52, %s53
      %p67 = scmp.eq.s32.totalorder %s24, 1
      %p68 = por %p66, %p67
      %p70 = scmp.ne.s32.totalorder %s53, %s69
      %p71 = scmp.eq.s32.totalorder %s24, 0
      %p72 = por %p70, %p71
      %s73 = ssub.s32 %s25, %s44
      %s74 = ssub.s32 %s27, %s36
      %s75 = sor.u32 %s73, %s74
      %p76 = scmp.eq.s32.totalorder %s75, 0
      %s78 = sadd.s32 %s77, 1
      %s79 = scalar_select %p76, %s77, %s78
      %p82 = pneg %p76
      %p83 = scmp.eq.s32.totalorder %s18, 1
      %p84 = por %p82, %p83
      %p85 = scmp.ne.s32.totalorder %s77, %s80
      %p86 = scmp.eq.s32.totalorder %s18, 0
      %p87 = por %p85, %p86
      %p88 = scmp.ne.s32.totalorder %s77, %s80
      %p89 = scmp.eq.s32.totalorder %s23, 1
      %p90 = por %p88, %p89
      %p91 = scmp.ne.s32.totalorder %s80, %s81
      %p92 = scmp.eq.s32.totalorder %s23, 0
      %p93 = por %p91, %p92
      %p94 = scmp.ne.s32.totalorder %s80, %s81
      %p95 = scmp.eq.s32.totalorder %s24, 1
      %p96 = por %p94, %p95
      %p98 = scmp.ne.s32.totalorder %s81, %s97
      %p99 = scmp.eq.s32.totalorder %s24, 0
      %p100 = por %p98, %p99
      %s102 = sadd.s32 %s101, 1
      %p105 = scmp.eq.s32.totalorder %s18, 1
      %p106 = scmp.ne.s32.totalorder %s101, %s103
      %p107 = scmp.eq.s32.totalorder %s18, 0
      %p108 = por %p106, %p107
      %p109 = scmp.ne.s32.totalorder %s101, %s103
      %p110 = scmp.eq.s32.totalorder %s23, 1
      %p111 = por %p109, %p110
      %p112 = scmp.ne.s32.totalorder %s103, %s104
      %p113 = scmp.eq.s32.totalorder %s23, 0
      %p114 = por %p112, %p113
      %p115 = scmp.ne.s32.totalorder %s103, %s104
      %p116 = scmp.eq.s32.totalorder %s24, 1
      %p117 = por %p115, %p116
      %p119 = scmp.ne.s32.totalorder %s104, %s118
      %p120 = scmp.eq.s32.totalorder %s24, 0
      %p121 = por %p119, %p120
      %s122 = ssub.s32 %s25, %s44
      %s123 = ssub.s32 %s26, %s40
      %s124 = sor.u32 %s122, %s123
      %s125 = ssub.s32 %s27, %s36
      %s126 = sor.u32 %s124, %s125
      %p127 = scmp.eq.s32.totalorder %s126, 0
      %s129 = sadd.s32 %s128, 1
      %s130 = scalar_select %p127, %s128, %s129
      %p133 = pneg %p127
      %p134 = scmp.eq.s32.totalorder %s18, 1
      %p135 = por %p133, %p134
      %p136 = scmp.ne.s32.totalorder %s128, %s131
      %p137 = scmp.eq.s32.totalorder %s18, 0
      %p138 = por %p136, %p137
      %p139 = scmp.ne.s32.totalorder %s128, %s131
      %p140 = scmp.eq.s32.totalorder %s23, 1
      %p141 = por %p139, %p140
      %p142 = scmp.ne.s32.totalorder %s131, %s132
      %p143 = scmp.eq.s32.totalorder %s23, 0
      %p144 = por %p142, %p143
      %p145 = scmp.ne.s32.totalorder %s131, %s132
      %p146 = scmp.eq.s32.totalorder %s24, 1
      %p147 = por %p145, %p146
      %p149 = scmp.ne.s32.totalorder %s132, %s148
      %p150 = scmp.eq.s32.totalorder %s24, 0
      %p151 = por %p149, %p150
      %p152 = scmp.le.s32.totalorder 1, %s18
      %p153 = scmp.lt.s32.totalorder %s18, 3
      %p154 = pnand %p152, %p153
      %p155 = pneg %p154
      // Predicated region
      $region9: #{tpu_custom_call.1} parent=5 // pred_check
        _
      $region10: #{tpu_custom_call.1} parent=5 // pred_check_branch
        %157 = sbr.rel (%p154) target = $region12
      $region11: #{tpu_custom_call.1} parent=5 // pred_region
        %s158 = ssub.s32 %s18, 1
        // Predicated region
        $region13: #{tpu_custom_call.1} parent=11 // pred_check
          %p159 = pneg %p114
        $region14: #{tpu_custom_call.1} parent=11 // pred_check_branch
          %161 = sbr.rel (%p159) target = $region16
        $region15: #{tpu_custom_call.1} parent=11 // pred_region
          %163 = vsyncadd [#allocation7], 0
          %s164 = sshll.u32 %s2, 4
          %s165 = int_to_ptr.hbm [resolvable:$true] %s164
          %s166 = sshll.u32 [#allocation8], 4
          %s167 = int_to_ptr.vmem [resolvable:$true] %s166
          %172 = dma.hbm_to_vmem [thread:$0]  %s165, 512, %s167, [#allocation7], 128, 128, 8
        $region16: #{tpu_custom_call.1} parent=11 // pred_fallthru
          _
      $region12: #{tpu_custom_call.1} parent=5 // pred_fallthru
        _
      %p173 = scmp.lt.s32.totalorder %s18, 2
      // Predicated region
      $region17: #{tpu_custom_call.1} parent=5 // pred_check
        %p174 = pneg %p173
      $region18: #{tpu_custom_call.1} parent=5 // pred_check_branch
        %176 = sbr.rel (%p174) target = $region20
      $region19: #{tpu_custom_call.1} parent=5 // pred_region
        // Predicated region
        $region21: #{tpu_custom_call.1} parent=19 // pred_check
          %p177 = pneg %p59
        $region22: #{tpu_custom_call.1} parent=19 // pred_check_branch
          %179 = sbr.rel (%p177) target = $region24
        $region23: #{tpu_custom_call.1} parent=19 // pred_region
          %s180 = sand.u32 %s49, 1
          %s181 = scalar_lea.sflag [#allocation4], %s180
          %s182 = sand.u32 %s49, 1
          %s183 = smul.addr %s182, 8
          %s184 = scalar_lea.vmem [#allocation3], %s183
          %186 = vsyncadd %s181, 0
          %s187 = sadd.s32 %s26, %s25
          %s188 = smul.addr %s187, 8
          %s189 = scalar_lea.hbm %s0, %s188
          %s191 = sshll.u32 %s189, 4
          %s192 = int_to_ptr.hbm [resolvable:$true] %s191
          %s193 = sshll.u32 %s184, 4
          %s194 = int_to_ptr.vmem [resolvable:$true] %s193
          %196 = dma.hbm_to_vmem [thread:$0]  %s192, 128, %s194, %s181
        $region24: #{tpu_custom_call.1} parent=19 // pred_fallthru
          _
        // Predicated region
        $region25: #{tpu_custom_call.1} parent=19 // pred_check
          %p197 = pneg %p87
        $region26: #{tpu_custom_call.1} parent=19 // pred_check_branch
          %199 = sbr.rel (%p197) target = $region28
        $region27: #{tpu_custom_call.1} parent=19 // pred_region
          %s200 = sand.u32 %s18, 1
          %s201 = scalar_lea.sflag [#allocation7], %s200
          %s202 = sand.u32 %s77, 1
          %s203 = smul.addr %s202, 8
          %s204 = scalar_lea.vmem [#allocation6], %s203
          %206 = vsyncadd %s201, 0
          %s207 = sadd.s32 %s27, %s25
          %s208 = smul.addr %s207, 8
          %s209 = scalar_lea.hbm %s1, %s208
          %s211 = sshll.u32 %s209, 4
          %s212 = int_to_ptr.hbm [resolvable:$true] %s211
          %s213 = sshll.u32 %s204, 4
          %s214 = int_to_ptr.vmem [resolvable:$true] %s213
          %216 = dma.hbm_to_vmem [thread:$0]  %s212, 128, %s214, %s201
        $region28: #{tpu_custom_call.1} parent=19 // pred_fallthru
          _
      $region20: #{tpu_custom_call.1} parent=5 // pred_fallthru
        _
      %p217 = scmp.le.s32.totalorder 1, %s18
      %p218 = scmp.lt.s32.totalorder %s18, 3
      %p219 = pnand %p217, %p218
      %p220 = pneg %p219
      // Predicated region
      $region29: #{tpu_custom_call.1} parent=5 // pred_check
        _
      $region30: #{tpu_custom_call.1} parent=5 // pred_check_branch
        %222 = sbr.rel (%p219) target = $region32
      $region31: #{tpu_custom_call.1} parent=5 // pred_region
        %s223 = ssub.s32 %s18, 1
        %s224 = sand.u32 %s52, 1
        %s225 = scalar_lea.sflag [#allocation4], %s224
        %s226 = sand.u32 %s52, 1
        %s227 = smul.addr %s226, 8
        %s228 = scalar_lea.vmem [#allocation3], %s227
        // Predicated region
        $region33: #{tpu_custom_call.1} parent=31 // pred_check
          %p229 = pneg %p65
        $region34: #{tpu_custom_call.1} parent=31 // pred_check_branch
          %231 = sbr.rel (%p229) target = $region36
        $region35: #{tpu_custom_call.1} parent=31 // pred_region
          %233 = dma.done %s225, 128
        $region36: #{tpu_custom_call.1} parent=31 // pred_fallthru
          _
        %s234 = sand.u32 %s23, 1
        %s235 = scalar_lea.sflag [#allocation7], %s234
        %s236 = sand.u32 %s80, 1
        %s237 = smul.addr %s236, 8
        %s238 = scalar_lea.vmem [#allocation6], %s237
        // Predicated region
        $region37: #{tpu_custom_call.1} parent=31 // pred_check
          %p239 = pneg %p93
        $region38: #{tpu_custom_call.1} parent=31 // pred_check_branch
          %241 = sbr.rel (%p239) target = $region40
        $region39: #{tpu_custom_call.1} parent=31 // pred_region
          %243 = dma.done %s235, 128
        $region40: #{tpu_custom_call.1} parent=31 // pred_fallthru
          _
        // Predicated region
        $region41: #{tpu_custom_call.1} parent=31 // pred_check
          %p244 = pneg %p114
        $region42: #{tpu_custom_call.1} parent=31 // pred_check_branch
          %246 = sbr.rel (%p244) target = $region44
        $region43: #{tpu_custom_call.1} parent=31 // pred_region
          %248 = dma.done [#allocation7], 512
        $region44: #{tpu_custom_call.1} parent=31 // pred_fallthru
          _
        %s249 = sand.u32 %s52, 1
        %s250 = scalar_lea.sflag [#allocation4], %s249
        %s251 = sand.u32 %s52, 1
        %s252 = smul.addr %s251, 8
        %s253 = scalar_lea.vmem [#allocation3], %s252
        %p254 = pneg %p65
        %p255 = pneg %p62
        %s256 = sand.u32 %s23, 1
        %s257 = scalar_lea.sflag [#allocation7], %s256
        %s258 = sand.u32 %s80, 1
        %s259 = smul.addr %s258, 8
        %s260 = scalar_lea.vmem [#allocation6], %s259
        %p261 = pneg %p93
        %p262 = pneg %p90
        %p263 = pneg %p114
        %p264 = pneg %p111
        %p265 = pneg %p144
        %p266 = pneg %p141
        %s267 = sand.u32 %s131, 1
        %s268 = scalar_lea.sflag [#allocation5], %s267
        %s269 = sand.u32 %s131, 1
        %s270 = smul.addr %s269, 8
        %s271 = scalar_lea.vmem [#allocation9], %s270
        %p272 = scmp.eq.s32.totalorder %s30, 0
        // Predicated region
        $region45: #{tpu_custom_call.1} parent=31 // pred_check
          %p273 = pneg %p272
        $region46: #{tpu_custom_call.1} parent=31 // pred_check_branch
          %275 = sbr.rel (%p273) target = $region48
        $region47: #{tpu_custom_call.1} parent=31 // pred_region
          %v276 = vld [vmem:[%s228] sm:$0xff]
          %v277 = vld [vmem:[#allocation8] sm:$0xff]
          %v278 = vld [vmem:[#allocation8 + $0x8] sm:$0xff]
          %v279 = vld [vmem:[#allocation8 + $0x10] sm:$0xff]
          %v280 = vld [vmem:[#allocation8 + $0x18] sm:$0xff]
          %vm281 = vcmask 261120
          %v283 = vsel %vm281, %v276, 0
          %285 = vmatpush.msra.mxu0 0.0
          %286 = vmatpush.msra.mxu0 0.0
          %287 = vmatpush.msra.mxu0 0.0
          %288 = vmatpush.msra.mxu0 0.0
          %289 = vmatpush.msra.mxu0 0.0
          %290 = vmatpush.msra.mxu0 0.0
          %291 = vmatpush.msra.mxu0 0.0
          %292 = vmatpush.msra.mxu0 0.0
          %293 = vmatpush.msra.mxu0 0.0
          %294 = vmatpush.msra.mxu0 0.0
          %295 = vmatpush.msra.mxu0 0.0
          %296 = vmatpush.msra.mxu0 0.0
          %297 = vmatpush.msra.mxu0 %v280
          %298 = vmatpush.msra.mxu0 %v279
          %299 = vmatpush.msra.mxu0 %v278
          %300 = vmatpush.msra.mxu0 %v277
          %301 = vmatmul.f32.gmra.mxu0 %v283
          %v302 = vpop.f32.mrf.mxu0
          %v303 = vadd.f32 0.0, %v302
          %304 = vdwg.mxu0
          %305 = vst.msk [vmem:[#allocation2] sm:$0xff] %vm281, %v303
        $region48: #{tpu_custom_call.1} parent=31 // pred_fallthru
          _
        %v306 = vld [vmem:[%s238] sm:$0xff]
        %v307 = vld [vmem:[#allocation2] sm:$0xff]
        %vm308 = vcmask 261120
        %v310 = vsel %vm308, %v307, 0
        %v313 = vsel %vm308, %v306, 0
        %315 = vmatpush.xpose.msra.mxu0 0.0
        %316 = vmatpush.xpose.msra.mxu0 0.0
        %317 = vmatpush.xpose.msra.mxu0 0.0
        %318 = vmatpush.xpose.msra.mxu0 0.0
        %319 = vmatpush.xpose.msra.mxu0 0.0
        %320 = vmatpush.xpose.msra.mxu0 0.0
        %321 = vmatpush.xpose.msra.mxu0 0.0
        %322 = vmatpush.xpose.msra.mxu0 0.0
        %323 = vmatpush.xpose.msra.mxu0 0.0
        %324 = vmatpush.xpose.msra.mxu0 0.0
        %325 = vmatpush.xpose.msra.mxu0 0.0
        %326 = vmatpush.xpose.msra.mxu0 0.0
        %327 = vmatpush.xpose.msra.mxu0 0.0
        %328 = vmatpush.xpose.msra.mxu0 0.0
        %329 = vmatpush.xpose.msra.mxu0 0.0
        %330 = vmatpush.xpose.msra.mxu0 %v313
        %331 = vmatmul.f32.gmra.mxu0 %v310
        %v332 = vpop.f32.mrf.mxu0
        %v333 = vadd.f32 0.0, %v332
        %334 = vdwg.mxu0
        %vm335 = vcmask 64512
        %336 = vst.msk [vmem:[%s271] sm:$0xff] %vm335, %v333
        %s337 = sand.u32 %s131, 1
        %s338 = scalar_lea.sflag [#allocation5], %s337
        %s339 = sand.u32 %s131, 1
        %s340 = smul.addr %s339, 8
        %s341 = scalar_lea.vmem [#allocation9], %s340
        // Predicated region
        $region49: #{tpu_custom_call.1} parent=31 // pred_check
          %p342 = pneg %p141
        $region50: #{tpu_custom_call.1} parent=31 // pred_check_branch
          %344 = sbr.rel (%p342) target = $region52
        $region51: #{tpu_custom_call.1} parent=31 // pred_region
          %346 = vsyncadd %s338, 0
          %s347 = sadd.s32 %s30, %s29
          %s348 = sadd.s32 %s347, %s28
          %s349 = smul.addr %s348, 8
          %s350 = scalar_lea.hbm %s3, %s349
          %s352 = sshll.u32 %s341, 4
          %s353 = int_to_ptr.vmem [resolvable:$true] %s352
          %s354 = sshll.u32 %s350, 4
          %s355 = int_to_ptr.hbm [resolvable:$true] %s354
          %357 = dma.vmem_to_hbm [thread:$0]  %s353, 128, %s355, %s338
        $region52: #{tpu_custom_call.1} parent=31 // pred_fallthru
          _
      $region32: #{tpu_custom_call.1} parent=5 // pred_fallthru
        _
      %p358 = scmp.le.s32.totalorder 2, %s18
      // Predicated region
      $region53: #{tpu_custom_call.1} parent=5 // pred_check
        %p359 = pneg %p358
      $region54: #{tpu_custom_call.1} parent=5 // pred_check_branch
        %361 = sbr.rel (%p359) target = $region56
      $region55: #{tpu_custom_call.1} parent=5 // pred_region
        %s362 = ssub.s32 %s18, 2
        // Predicated region
        $region57: #{tpu_custom_call.1} parent=55 // pred_check
          %p363 = pneg %p147
        $region58: #{tpu_custom_call.1} parent=55 // pred_check_branch
          %365 = sbr.rel (%p363) target = $region60
        $region59: #{tpu_custom_call.1} parent=55 // pred_region
          %s366 = sand.u32 %s132, 1
          %s367 = scalar_lea.sflag [#allocation5], %s366
          %s368 = sand.u32 %s132, 1
          %s369 = smul.addr %s368, 8
          %s370 = scalar_lea.vmem [#allocation9], %s369
          %372 = dma.done %s367, 128
        $region60: #{tpu_custom_call.1} parent=55 // pred_fallthru
          _
      $region56: #{tpu_custom_call.1} parent=5 // pred_fallthru
        _
    $region6: #{tpu_custom_call.1} parent=1 // loop_footer
      %s22 = sadd.s32 1, %s18
    $region7: #{tpu_custom_call.1} parent=1 // loop_footer_branch
      %17 = sbr.rel target = $region3
    $region8: #{tpu_custom_call.1} parent=1 // loop_exit
      _
    %373 = vsyncpa [#allocation4], 1
    %s374 = scalar_lea.sflag [#allocation4], 1
    %375 = vsyncpa %s374, 1
    %376 = vsyncpa [#allocation7], 1
    %s377 = scalar_lea.sflag [#allocation7], 1
    %378 = vsyncpa %s377, 1
    %379 = vsyncpa [#allocation5], 1
    %s380 = scalar_lea.sflag [#allocation5], 1
    %381 = vsyncpa %s380, 1

</llo_original>
